<compile_context>
chip_gen: v7x
topology: tpu7x:2x2x1
jax: 0.10.0
libtpu: 0.0.40
codegen_flags: <defaults>
</compile_context>

<pallas_src>
import functools

import jax
import jax.numpy as jnp
from jax.experimental import pallas as pl
from jax.experimental.pallas import tpu as pltpu

LANE = 128
ROW_PAD = 512                            # pad node count to a multiple of this (when >= 512)
X_RESIDENT_MAX_BYTES = 8 * 1024 * 1024   # keep features fully VMEM-resident below this


def _round_up(x, m):
    return ((x + m - 1) // m) * m


def _pick_tile(n_pad, cap):
    """Largest multiple of 128 that divides n_pad and is <= cap (n_pad % 128 == 0)."""
    best = LANE
    t = LANE
    while t <= min(cap, n_pad):
        if n_pad % t == 0:
            best = t
        t += LANE
    return best


def _pad2d(a, rows, cols, dtype):
    out = jnp.zeros((rows, cols), dtype)
    return out.at[: a.shape[0], : a.shape[1]].set(a.astype(dtype))


def _vmem_limit_bytes(buffer_bytes):
    """Generation-aware VMEM limit: actual need + headroom, capped at 75% of physical."""
    try:
        phys = pltpu.get_tpu_info().vmem_capacity_bytes
    except Exception:  # pragma: no cover - conservative fallback (v7x per-TC size)
        phys = 64 * 1024 * 1024
    cap = (phys * 3) // 4
    need = int(buffer_bytes * 1.25) + (4 << 20)
    need = max(need, 32 << 20)            # never below the usual scoped default
    return int(min(need, cap))


def gin_conv_kernel(a_ref, x_ref, w1_ref, b1_ref, w2_ref, b2_ref,
                    out_ref, acc_ref, *, final_relu, x_resident, tk):
    """One GINConv: out = MLP(A_hat @ x), MLP = Linear->ReLU->Linear[->ReLU]."""
    k = pl.program_id(1)

    @pl.when(k == 0)
    def _init():
        acc_ref[...] = jnp.zeros_like(acc_ref)

    # A_hat is int8 in HBM; the cast to bf16 rides the VPU (free: DMA-bound).
    a_tile = a_ref[...].astype(jnp.bfloat16)
    if x_resident:
        start = pl.multiple_of(k * tk, tk)
        x_tile = x_ref[pl.ds(start, tk), :]
    else:
        x_tile = x_ref[...]
    # Tiled aggregation: acc[i_block] += A_hat[i_block, k_block] @ x[k_block]
    acc_ref[...] += jnp.dot(a_tile, x_tile, preferred_element_type=jnp.float32)

    @pl.when(k == pl.num_programs(1) - 1)
    def _finalize():
        agg = acc_ref[...].astype(jnp.bfloat16)
        h = jnp.dot(agg, w1_ref[...],
                    preferred_element_type=jnp.float32) + b1_ref[...]
        h = jnp.maximum(h, 0.0)
        h = jnp.dot(h.astype(jnp.bfloat16), w2_ref[...],
                    preferred_element_type=jnp.float32) + b2_ref[...]
        if final_relu:
            h = jnp.maximum(h, 0.0)
        out_ref[...] = h.astype(out_ref.dtype)


def _gin_conv(a, x, w1, b1, w2, b2, *, final_relu, out_dtype, tm, tk):
    n_pad = a.shape[0]
    f_in = x.shape[1]
    h_mid = w1.shape[1]
    f_out = w2.shape[1]
    grid = (n_pad // tm, n_pad // tk)

    # Keep the feature matrix fully VMEM-resident when it fits, so it is not
    # re-streamed once per row block (the A_hat stream stays the only big one).
    x_bytes = int(x.size) * x.dtype.itemsize
    x_resident = x_bytes <= X_RESIDENT_MAX_BYTES
    if x_resident:
        x_spec = pl.BlockSpec((n_pad, f_in), lambda i, k: (0, 0))
    else:
        x_spec = pl.BlockSpec((tk, f_in), lambda i, k: (k, 0))

    w_bytes = sum(int(arr.size) * arr.dtype.itemsize for arr in (w1, b1, w2, b2))
    buf_bytes = (2 * tm * tk * a.dtype.itemsize                       # A tile (2 bufs)
                 + 2 * (x_bytes if x_resident else tk * f_in * x.dtype.itemsize)
                 + 2 * w_bytes                                        # resident weights
                 + 2 * tm * f_out * jnp.dtype(out_dtype).itemsize     # out tile (2 bufs)
                 + tm * f_in * 4)                                     # f32 accumulator

    kernel = functools.partial(gin_conv_kernel, final_relu=final_relu,
                               x_resident=x_resident, tk=tk)
    return pl.pallas_call(
        kernel,
        out_shape=jax.ShapeDtypeStruct((n_pad, f_out), out_dtype),
        grid=grid,
        in_specs=[
            pl.BlockSpec((tm, tk), lambda i, k: (i, k)),        # A_hat tile (int8)
            x_spec,                                             # features
            pl.BlockSpec((f_in, h_mid), lambda i, k: (0, 0)),   # W1 (resident)
            pl.BlockSpec((1, h_mid), lambda i, k: (0, 0)),      # b1 (resident)
            pl.BlockSpec((h_mid, f_out), lambda i, k: (0, 0)),  # W2 (resident)
            pl.BlockSpec((1, f_out), lambda i, k: (0, 0)),      # b2 (resident)
        ],
        out_specs=pl.BlockSpec((tm, f_out), lambda i, k: (i, 0)),
        scratch_shapes=[pltpu.VMEM((tm, f_in), jnp.float32)],
        compiler_params=pltpu.CompilerParams(
            dimension_semantics=("parallel", "arbitrary"),
            vmem_limit_bytes=_vmem_limit_bytes(buf_bytes),
        ),
    )(a, x, w1, b1, w2, b2)


def _build_a_hat(edge_index, N, n_pad, eps):
    """Dense GIN aggregation matrix A_hat[dst, src] = edge counts + (1+eps)*I.

    Stored int8 (halves the dominant HBM stream; exact for per-pair edge
    multiplicity <= 127). Built directly in int8 -- no f32 NxN intermediate.
    Falls back to bf16 when eps is non-zero (int8 can't hold 1+eps).
    """
    src = edge_index[0].astype(jnp.int32)
    dst = edge_index[1].astype(jnp.int32)
    diag = jnp.arange(N)
    if float(eps) == 0.0:
        A = jnp.zeros((n_pad, n_pad), jnp.int8)
        A = A.at[dst, src].add(1)
        A = A.at[diag, diag].add(1)
    else:
        A = jnp.zeros((n_pad, n_pad), jnp.bfloat16)
        A = A.at[dst, src].add(1.0)
        A = A.at[diag, diag].add(1.0 + eps)
    return A


def gin_forward(x, edge_index, params, *, eps=0.0, tm_cap=512, tk_cap=2048):
    """x: [N, F] float32, edge_index: [2, E] int (row0 = src, row1 = dst)."""
    N, F = x.shape
    hidden = params["w1"].shape[1]
    num_classes = params["w4"].shape[1]

    # Pad the node count so large tiles divide it exactly (never a 128 fallback);
    # a few % extra rows is cheaper than the per-step grid overhead they remove.
    n128 = _round_up(N, LANE)
    n_pad = _round_up(N, ROW_PAD) if n128 >= ROW_PAD else n128
    f_pad = _round_up(F, LANE)
    h_pad = _round_up(hidden, LANE)
    c_pad = _round_up(num_classes, LANE)

    tm = _pick_tile(n_pad, tm_cap)
    tk = _pick_tile(n_pad, tk_cap)
    # v7x megacore: keep >= 2 row blocks so both TensorCores get work.
    if n_pad // tm < 2 and n_pad >= 2 * LANE:
        tm = _pick_tile(n_pad, n_pad // 2)

    a_hat = _build_a_hat(edge_index, N, n_pad, eps)

    x_p = _pad2d(x, n_pad, f_pad, jnp.bfloat16)
    w1 = _pad2d(params["w1"], f_pad, h_pad, jnp.bfloat16)
    b1 = _pad2d(params["b1"], 1, h_pad, jnp.float32)
    w2 = _pad2d(params["w2"], h_pad, h_pad, jnp.bfloat16)
    b2 = _pad2d(params["b2"], 1, h_pad, jnp.float32)
    w3 = _pad2d(params["w3"], h_pad, h_pad, jnp.bfloat16)
    b3 = _pad2d(params["b3"], 1, h_pad, jnp.float32)
    w4 = _pad2d(params["w4"], h_pad, c_pad, jnp.bfloat16)
    b4 = _pad2d(params["b4"], 1, c_pad, jnp.float32)

    # conv1 (MLP ends in ReLU; the explicit torch.relu in forward is a no-op).
    h = _gin_conv(a_hat, x_p, w1, b1, w2, b2,
                  final_relu=True, out_dtype=jnp.bfloat16, tm=tm, tk=tk)
    # conv2 (Linear -> ReLU -> Linear, no trailing activation).
    out = _gin_conv(a_hat, h, w3, b3, w4, b4,
                    final_relu=False, out_dtype=jnp.float32, tm=tm, tk=tk)
    return out[:N, :num_classes]


def init_params(key, num_features, num_classes, hidden=64):
    ks = jax.random.split(key, 8)

    def lin(kw, fan_in, fan_out):
        bound = 1.0 / jnp.sqrt(fan_in)
        return jax.random.uniform(kw, (fan_in, fan_out), jnp.float32, -bound, bound)

    return {
        "w1": lin(ks[0], num_features, hidden),
        "b1": jax.random.uniform(ks[1], (1, hidden), jnp.float32, -0.1, 0.1),
        "w2": lin(ks[2], hidden, hidden),
        "b2": jax.random.uniform(ks[3], (1, hidden), jnp.float32, -0.1, 0.1),
        "w3": lin(ks[4], hidden, hidden),
        "b3": jax.random.uniform(ks[5], (1, hidden), jnp.float32, -0.1, 0.1),
        "w4": lin(ks[6], hidden, num_classes),
        "b4": jax.random.uniform(ks[7], (1, num_classes), jnp.float32, -0.1, 0.1),
    }


def _dense_a(x, edge_index, eps):
    N = x.shape[0]
    src, dst = edge_index[0], edge_index[1]
    A = jnp.zeros((N, N), jnp.float32).at[dst, src].add(1.0)
    return A + (1.0 + eps) * jnp.eye(N, dtype=jnp.float32)


def gin_reference_f32(x, edge_index, params, *, eps=0.0):
    """Pure-f32 JAX reference of the PyTorch forward."""
    A = _dense_a(x, edge_index, eps)
    h = A @ x
    h = jax.nn.relu(h @ params["w1"] + params["b1"])
    h = jax.nn.relu(h @ params["w2"] + params["b2"])
    h = jax.nn.relu(h)                      # explicit relu in forward (no-op)
    h = A @ h
    h = jax.nn.relu(h @ params["w3"] + params["b3"])
    return h @ params["w4"] + params["b4"]


def _bf16_dot(a, b):
    return jnp.dot(a.astype(jnp.bfloat16), b.astype(jnp.bfloat16),
                   preferred_element_type=jnp.float32)


def gin_reference_matched(x, edge_index, params, *, eps=0.0):
    """Plain-JAX reference with the same bf16 cast points as the kernel."""
    A = _dense_a(x, edge_index, eps)
    agg = _bf16_dot(A, x)
    h = jnp.maximum(_bf16_dot(agg, params["w1"]) + params["b1"], 0.0)
    h = jnp.maximum(_bf16_dot(h, params["w2"]) + params["b2"], 0.0)
    h = h.astype(jnp.bfloat16).astype(jnp.float32)   # conv1 output stored bf16
    agg = _bf16_dot(A, h)
    h2 = jnp.maximum(_bf16_dot(agg, params["w3"]) + params["b3"], 0.0)
    return _bf16_dot(h2, params["w4"]) + params["b4"]


def _random_graph(key, n_nodes, n_feat, n_edges):
    kx, ks, kd = jax.random.split(key, 3)
    x = jax.random.normal(kx, (n_nodes, n_feat), jnp.float32)
    edge_index = jnp.stack([
        jax.random.randint(ks, (n_edges,), 0, n_nodes, dtype=jnp.int32),
        jax.random.randint(kd, (n_edges,), 0, n_nodes, dtype=jnp.int32),
    ], axis=0)
    return x, edge_index


if __name__ == "__main__":
    num_features, num_classes = 8, 4
    key = jax.random.PRNGKey(0)
    kg, kp = jax.random.split(key, 2)

    params = init_params(kp, num_features, num_classes)

    # --- small graph (exercises the 128-wide fallback + resident-x path) ---
    x, edge_index = _random_graph(kg, 16, num_features, 48)
    out = jax.block_until_ready(gin_forward(x, edge_index, params))
    assert out.shape == (16, num_classes)

    ref_matched = gin_reference_matched(x, edge_index, params)
    assert jnp.allclose(out, ref_matched, atol=5e-2, rtol=5e-2), \
        float(jnp.max(jnp.abs(out - ref_matched)))
    ref_f32 = gin_reference_f32(x, edge_index, params)
    assert jnp.allclose(out, ref_f32, atol=5e-1, rtol=2e-1), \
        float(jnp.max(jnp.abs(out - ref_f32)))

    # --- moderate graph (exercises 512-row padding, tm=512/tk=1024, 2 row blocks) ---
    x2, edge_index2 = _random_graph(jax.random.PRNGKey(1), 600, num_features, 4000)
    out2 = jax.block_until_ready(gin_forward(x2, edge_index2, params))
    assert out2.shape == (600, num_classes)
    ref2 = gin_reference_matched(x2, edge_index2, params)
    assert jnp.allclose(out2, ref2, atol=5e-2, rtol=5e-2), \
        float(jnp.max(jnp.abs(out2 - ref2)))

    print("KERNEL_OK")
</pallas_src>

<mosaic_0001>
module attributes {stable_mosaic.version = 11 : i64} {
  func.func @gin_conv_kernel(%arg0: i32, %arg1: i32, %arg2: memref<128x128xi8, #tpu.memory_space<vmem>>, %arg3: memref<128x128xbf16, #tpu.memory_space<vmem>>, %arg4: memref<128x128xbf16, #tpu.memory_space<vmem>>, %arg5: memref<1x128xf32, #tpu.memory_space<vmem>>, %arg6: memref<128x128xbf16, #tpu.memory_space<vmem>>, %arg7: memref<1x128xf32, #tpu.memory_space<vmem>>, %arg8: memref<128x128xbf16, #tpu.memory_space<vmem>>, %arg9: memref<128x128xf32, #tpu.memory_space<vmem>>) attributes {dimension_semantics = [#tpu.dimension_semantics<parallel>, #tpu.dimension_semantics<arbitrary>], iteration_bounds = array<i64: 1, 1>, scalar_prefetch = 0 : i64, scratch_operands = 1 : i64, tpu.core_type = #tpu.core_type<tc>, window_params = [{transform_indices = @transform_0, window_bounds = array<i64: 128, 128>}, {pipeline_mode = #tpu.pipeline_mode<synchronous>, transform_indices = @transform_1, window_bounds = array<i64: 128, 128>}, {pipeline_mode = #tpu.pipeline_mode<synchronous>, transform_indices = @transform_2, window_bounds = array<i64: 128, 128>}, {pipeline_mode = #tpu.pipeline_mode<synchronous>, transform_indices = @transform_3, window_bounds = array<i64: 1, 128>}, {pipeline_mode = #tpu.pipeline_mode<synchronous>, transform_indices = @transform_4, window_bounds = array<i64: 128, 128>}, {pipeline_mode = #tpu.pipeline_mode<synchronous>, transform_indices = @transform_5, window_bounds = array<i64: 1, 128>}, {transform_indices = @transform_6, window_bounds = array<i64: 128, 128>}]} {
    %c0_i32 = arith.constant 0 : i32
    %0 = arith.cmpi eq, %arg1, %c0_i32 : i32
    %1 = arith.extui %0 : i1 to i32
    %c0_i32_0 = arith.constant 0 : i32
    %2 = arith.cmpi ne, %1, %c0_i32_0 : i32
    scf.if %2 {
      %cst_9 = arith.constant 0.000000e+00 : f32
      %16 = vector.broadcast %cst_9 : f32 to vector<128x128xf32>
      %c0_10 = arith.constant 0 : index
      %c0_11 = arith.constant 0 : index
      %17 = vector.load %arg9[%c0_10, %c0_11] : memref<128x128xf32, #tpu.memory_space<vmem>>, vector<128x128xf32>
      tpu.vector_store %arg9[%c0_10, %c0_11], %16 {strides = array<i32>} : memref<128x128xf32, #tpu.memory_space<vmem>>, vector<128x128xf32>,
    } else {
    }
    %c0 = arith.constant 0 : index
    %c0_1 = arith.constant 0 : index
    %3 = vector.load %arg2[%c0, %c0_1] : memref<128x128xi8, #tpu.memory_space<vmem>>, vector<128x128xi8>
    %4 = arith.sitofp %3 : vector<128x128xi8> to vector<128x128xbf16>
    %c128_i32 = arith.constant 128 : i32
    %5 = arith.muli %arg1, %c128_i32 : i32
    %6 = tpu.assume_multiple %5, 128 : i32
    %7 = arith.index_cast %6 : i32 to index
    %c0_2 = arith.constant 0 : index
    %8 = vector.load %arg3[%7, %c0_2] : memref<128x128xbf16, #tpu.memory_space<vmem>>, vector<128x128xbf16>
    %c0_3 = arith.constant 0 : index
    %c0_4 = arith.constant 0 : index
    %9 = vector.load %arg9[%c0_3, %c0_4] : memref<128x128xf32, #tpu.memory_space<vmem>>, vector<128x128xf32>
    %cst = arith.constant dense<0.000000e+00> : vector<128x128xf32>
    %10 = tpu.matmul %4, %8, %cst {dimension_numbers = #tpu.dot_dimension_numbers<[1], [0], [0], [1], [0, 0, 1, 1], [], []>} : vector<128x128xbf16>, vector<128x128xbf16>, vector<128x128xf32> -> vector<128x128xf32>
    %11 = arith.addf %9, %10 : vector<128x128xf32>
    %c0_5 = arith.constant 0 : index
    %c0_6 = arith.constant 0 : index
    %12 = vector.load %arg9[%c0_5, %c0_6] : memref<128x128xf32, #tpu.memory_space<vmem>>, vector<128x128xf32>
    tpu.vector_store %arg9[%c0_5, %c0_6], %11 {strides = array<i32>} : memref<128x128xf32, #tpu.memory_space<vmem>>, vector<128x128xf32>,
    %c0_i32_7 = arith.constant 0 : i32
    %13 = arith.cmpi eq, %arg1, %c0_i32_7 : i32
    %14 = arith.extui %13 : i1 to i32
    %c0_i32_8 = arith.constant 0 : i32
    %15 = arith.cmpi ne, %14, %c0_i32_8 : i32
    scf.if %15 {
      %c0_9 = arith.constant 0 : index
      %c0_10 = arith.constant 0 : index
      %16 = vector.load %arg9[%c0_9, %c0_10] : memref<128x128xf32, #tpu.memory_space<vmem>>, vector<128x128xf32>
      %17 = arith.truncf %16 : vector<128x128xf32> to vector<128x128xbf16>
      %c0_11 = arith.constant 0 : index
      %c0_12 = arith.constant 0 : index
      %18 = vector.load %arg4[%c0_11, %c0_12] : memref<128x128xbf16, #tpu.memory_space<vmem>>, vector<128x128xbf16>
      %cst_13 = arith.constant dense<0.000000e+00> : vector<128x128xf32>
      %19 = tpu.matmul %17, %18, %cst_13 {dimension_numbers = #tpu.dot_dimension_numbers<[1], [0], [0], [1], [0, 0, 1, 1], [], []>} : vector<128x128xbf16>, vector<128x128xbf16>, vector<128x128xf32> -> vector<128x128xf32>
      %c0_14 = arith.constant 0 : index
      %c0_15 = arith.constant 0 : index
      %20 = vector.load %arg5[%c0_14, %c0_15] : memref<1x128xf32, #tpu.memory_space<vmem>>, vector<1x128xf32>
      %21 = vector.broadcast %20 : vector<1x128xf32> to vector<128x128xf32>
      %22 = arith.addf %19, %21 : vector<128x128xf32>
      %cst_16 = arith.constant 0.000000e+00 : f32
      %23 = vector.broadcast %cst_16 : f32 to vector<128x128xf32>
      %24 = arith.maximumf %22, %23 : vector<128x128xf32>
      %25 = arith.truncf %24 : vector<128x128xf32> to vector<128x128xbf16>
      %c0_17 = arith.constant 0 : index
      %c0_18 = arith.constant 0 : index
      %26 = vector.load %arg6[%c0_17, %c0_18] : memref<128x128xbf16, #tpu.memory_space<vmem>>, vector<128x128xbf16>
      %cst_19 = arith.constant dense<0.000000e+00> : vector<128x128xf32>
      %27 = tpu.matmul %25, %26, %cst_19 {dimension_numbers = #tpu.dot_dimension_numbers<[1], [0], [0], [1], [0, 0, 1, 1], [], []>} : vector<128x128xbf16>, vector<128x128xbf16>, vector<128x128xf32> -> vector<128x128xf32>
      %c0_20 = arith.constant 0 : index
      %c0_21 = arith.constant 0 : index
      %28 = vector.load %arg7[%c0_20, %c0_21] : memref<1x128xf32, #tpu.memory_space<vmem>>, vector<1x128xf32>
      %29 = vector.broadcast %28 : vector<1x128xf32> to vector<128x128xf32>
      %30 = arith.addf %27, %29 : vector<128x128xf32>
      %cst_22 = arith.constant 0.000000e+00 : f32
      %31 = vector.broadcast %cst_22 : f32 to vector<128x128xf32>
      %32 = arith.maximumf %30, %31 : vector<128x128xf32>
      %33 = arith.truncf %32 : vector<128x128xf32> to vector<128x128xbf16>
      %c0_23 = arith.constant 0 : index
      %c0_24 = arith.constant 0 : index
      %34 = vector.load %arg8[%c0_23, %c0_24] : memref<128x128xbf16, #tpu.memory_space<vmem>>, vector<128x128xbf16>
      tpu.vector_store %arg8[%c0_23, %c0_24], %33 {strides = array<i32>} : memref<128x128xbf16, #tpu.memory_space<vmem>>, vector<128x128xbf16>,
    } else {
    }
    return
  }
  func.func @transform_0(%arg0: i32, %arg1: i32) -> (i32, i32) {
    %c0_i32 = arith.constant 0 : i32
    return %arg0, %arg1 : i32, i32
  }
  func.func @transform_1(%arg0: i32, %arg1: i32) -> (i32, i32) {
    %c0_i32 = arith.constant 0 : i32
    %c0_i32_0 = arith.constant 0 : i32
    %c0_i32_1 = arith.constant 0 : i32
    return %c0_i32, %c0_i32_0 : i32, i32
  }
  func.func @transform_2(%arg0: i32, %arg1: i32) -> (i32, i32) {
    %c0_i32 = arith.constant 0 : i32
    %c0_i32_0 = arith.constant 0 : i32
    %c0_i32_1 = arith.constant 0 : i32
    return %c0_i32, %c0_i32_0 : i32, i32
  }
  func.func @transform_3(%arg0: i32, %arg1: i32) -> (i32, i32) {
    %c0_i32 = arith.constant 0 : i32
    %c0_i32_0 = arith.constant 0 : i32
    %c0_i32_1 = arith.constant 0 : i32
    return %c0_i32, %c0_i32_0 : i32, i32
  }
  func.func @transform_4(%arg0: i32, %arg1: i32) -> (i32, i32) {
    %c0_i32 = arith.constant 0 : i32
    %c0_i32_0 = arith.constant 0 : i32
    %c0_i32_1 = arith.constant 0 : i32
    return %c0_i32, %c0_i32_0 : i32, i32
  }
  func.func @transform_5(%arg0: i32, %arg1: i32) -> (i32, i32) {
    %c0_i32 = arith.constant 0 : i32
    %c0_i32_0 = arith.constant 0 : i32
    %c0_i32_1 = arith.constant 0 : i32
    return %c0_i32, %c0_i32_0 : i32, i32
  }
  func.func @transform_6(%arg0: i32, %arg1: i32) -> (i32, i32) {
    %c0_i32 = arith.constant 0 : i32
    %c0_i32_0 = arith.constant 0 : i32
    return %arg0, %c0_i32 : i32, i32
  }
}

</mosaic_0001>

<llo_original>
// kernel: tpu_custom_call.1
$region0: #{tpu_custom_call.1}
  #allocation0 [shape = 'u32[]', space=smem, size = 0x4, offset = 0x4, fixed_abs, tag = 'smem constant byte address 0x4 - core index']
  #allocation1 [shape = 'u32[144,128]{1,0:T(1,128)}', space=vmem, size = 0x12000, scoped, tag = 'internal scratch']
  #allocation2 [shape = 'f32[128,128]{1,0:T(8,128)}', space=vmem, size = 0x10000, scoped, tag = 'scratch operand']
  %s0 = inlined_call_operand.hbm [shape: s8[128,128], index: 0, kind: input, shape index: {}]
  %s1 = inlined_call_operand.hbm [shape: bf16[128,128], index: 1, kind: input, shape index: {}]
  %s2 = inlined_call_operand.hbm [shape: bf16[128,128], index: 2, kind: input, shape index: {}]
  %s3 = inlined_call_operand.vmem [shape: f32[1,128], index: 3, kind: input, shape index: {}]
  %s4 = inlined_call_operand.hbm [shape: bf16[128,128], index: 4, kind: input, shape index: {}]
  %s5 = inlined_call_operand.vmem [shape: f32[1,128], index: 5, kind: input, shape index: {}]
  %s6 = inlined_call_operand.hbm [shape: bf16[128,128], index: 6, kind: output, shape index: {}]
  %s7 = sld [smem:[#allocation0]]
  $region58: #{tpu_custom_call.1} parent=0
    _
  %s9 = ssub.s32 1, %s7
  %s10 = scalar_select 0, %s9, %s7
  $region1: #{tpu_custom_call.1} parent=0
    #allocation3 [shape = 'u8[16384]{0}', space=vmem, size = 0x4000, scoped, tag = 'input window, operand 0, single buffered']
    #allocation4 [shape = 's32[1]{0}', space=sflag, size = 0x4, scoped, tag = 'scoped memory for tpu_custom_call.1']
    #allocation5 [shape = 's32[1]{0}', space=sflag, size = 0x4, scoped, tag = 'scoped memory for tpu_custom_call.1']
    #allocation6 [shape = 'u8[32768]{0}', space=vmem, size = 0x8000, scoped, tag = 'input window, operand 1, single buffered']
    #allocation7 [shape = 's32[1]{0}', space=sflag, size = 0x4, scoped, tag = 'scoped memory for tpu_custom_call.1']
    #allocation8 [shape = 'u8[32768]{0}', space=vmem, size = 0x8000, scoped, tag = 'input window, operand 2, single buffered']
    #allocation9 [shape = 'u8[32768]{0}', space=vmem, size = 0x8000, scoped, tag = 'input window, operand 4, single buffered']
    #allocation10 [shape = 's32[1]{0}', space=sflag, size = 0x4, scoped, tag = 'scoped memory for tpu_custom_call.1']
    #allocation11 [shape = 'u8[32768]{0}', space=vmem, size = 0x8000, scoped, tag = 'output window, operand 0, single buffered']
    %11 = vsyncpa [#allocation4], 0
    %12 = vsyncpa [#allocation7], 0
    %13 = vsyncpa [#allocation10], 0
    %14 = vsyncpa [#allocation5], 0
    // Predicated region
    $region2: #{tpu_custom_call.1} parent=1 // pred_check
      _
    $region3: #{tpu_custom_call.1} parent=1 // pred_check_branch
      %16 = sbr.rel (0) target = $region5
    $region4: #{tpu_custom_call.1} parent=1 // pred_region
      %s18 = ssub.s32 512, 512
      %19 = vsyncadd [#allocation4], %s18
      %s20 = sshll.u32 [#allocation3], 4
      %s21 = int_to_ptr.vmem [resolvable:$true] %s20
      %26 = dma.hbm_to_vmem [thread:$0]  %s0, 512, %s21, [#allocation4], 128, 128, 8
    $region5: #{tpu_custom_call.1} parent=1 // pred_fallthru
      _
    // Predicated region
    $region6: #{tpu_custom_call.1} parent=1 // pred_check
      _
    $region7: #{tpu_custom_call.1} parent=1 // pred_check_branch
      %28 = sbr.rel (0) target = $region9
    $region8: #{tpu_custom_call.1} parent=1 // pred_region
      %s30 = ssub.s32 1024, 1024
      %31 = vsyncadd [#allocation7], %s30
      %s32 = sshll.u32 [#allocation6], 4
      %s33 = int_to_ptr.vmem [resolvable:$true] %s32
      %38 = dma.hbm_to_vmem [thread:$0]  %s1, 1024, %s33, [#allocation7], 64, 64, 4
    $region9: #{tpu_custom_call.1} parent=1 // pred_fallthru
      _
    // Predicated region
    $region10: #{tpu_custom_call.1} parent=1 // pred_check
      _
    $region11: #{tpu_custom_call.1} parent=1 // pred_check_branch
      %40 = sbr.rel (0) target = $region13
    $region12: #{tpu_custom_call.1} parent=1 // pred_region
      %s42 = ssub.s32 1024, 1024
      %43 = vsyncadd [#allocation7], %s42
      %s44 = sshll.u32 [#allocation8], 4
      %s45 = int_to_ptr.vmem [resolvable:$true] %s44
      %50 = dma.hbm_to_vmem [thread:$0]  %s2, 1024, %s45, [#allocation7], 64, 64, 4
    $region13: #{tpu_custom_call.1} parent=1 // pred_fallthru
      _
    // Predicated region
    $region14: #{tpu_custom_call.1} parent=1 // pred_check
      _
    $region15: #{tpu_custom_call.1} parent=1 // pred_check_branch
      %52 = sbr.rel (0) target = $region17
    $region16: #{tpu_custom_call.1} parent=1 // pred_region
      _
    $region17: #{tpu_custom_call.1} parent=1 // pred_fallthru
      _
    // Predicated region
    $region18: #{tpu_custom_call.1} parent=1 // pred_check
      _
    $region19: #{tpu_custom_call.1} parent=1 // pred_check_branch
      %54 = sbr.rel (0) target = $region21
    $region20: #{tpu_custom_call.1} parent=1 // pred_region
      %s56 = ssub.s32 1024, 1024
      %57 = vsyncadd [#allocation10], %s56
      %s58 = sshll.u32 [#allocation9], 4
      %s59 = int_to_ptr.vmem [resolvable:$true] %s58
      %64 = dma.hbm_to_vmem [thread:$0]  %s4, 1024, %s59, [#allocation10], 64, 64, 4
    $region21: #{tpu_custom_call.1} parent=1 // pred_fallthru
      _
    // Predicated region
    $region22: #{tpu_custom_call.1} parent=1 // pred_check
      _
    $region23: #{tpu_custom_call.1} parent=1 // pred_check_branch
      %66 = sbr.rel (0) target = $region25
    $region24: #{tpu_custom_call.1} parent=1 // pred_region
      _
    $region25: #{tpu_custom_call.1} parent=1 // pred_fallthru
      _
    // Predicated region
    $region26: #{tpu_custom_call.1} parent=1 // pred_check
      _
    $region27: #{tpu_custom_call.1} parent=1 // pred_check_branch
      %68 = sbr.rel (0) target = $region29
    $region28: #{tpu_custom_call.1} parent=1 // pred_region
      %69 = dma.done [#allocation4], 512
    $region29: #{tpu_custom_call.1} parent=1 // pred_fallthru
      _
    // Predicated region
    $region30: #{tpu_custom_call.1} parent=1 // pred_check
      _
    $region31: #{tpu_custom_call.1} parent=1 // pred_check_branch
      %71 = sbr.rel (0) target = $region33
    $region32: #{tpu_custom_call.1} parent=1 // pred_region
      %72 = dma.done [#allocation7], 1024
    $region33: #{tpu_custom_call.1} parent=1 // pred_fallthru
      _
    // Predicated region
    $region34: #{tpu_custom_call.1} parent=1 // pred_check
      _
    $region35: #{tpu_custom_call.1} parent=1 // pred_check_branch
      %74 = sbr.rel (0) target = $region37
    $region36: #{tpu_custom_call.1} parent=1 // pred_region
      %75 = dma.done [#allocation7], 1024
    $region37: #{tpu_custom_call.1} parent=1 // pred_fallthru
      _
    // Predicated region
    $region38: #{tpu_custom_call.1} parent=1 // pred_check
      _
    $region39: #{tpu_custom_call.1} parent=1 // pred_check_branch
      %77 = sbr.rel (0) target = $region41
    $region40: #{tpu_custom_call.1} parent=1 // pred_region
      %78 = dma.done [#allocation10], 1024
    $region41: #{tpu_custom_call.1} parent=1 // pred_fallthru
      _
    %p80 = scmp.eq.s32.totalorder 0, 0
    // Predicated region
    $region42: #{tpu_custom_call.1} parent=1 // pred_check
      %p81 = pneg %p80
    $region43: #{tpu_custom_call.1} parent=1 // pred_check_branch
      %83 = sbr.rel (%p81) target = $region45
    $region44: #{tpu_custom_call.1} parent=1 // pred_region
      %84 = vst [vmem:[#allocation2] sm:$0xff] 0.0
      %85 = vst [vmem:[#allocation2 + $0x8] sm:$0xff] 0.0
      %86 = vst [vmem:[#allocation2 + $0x10] sm:$0xff] 0.0
      %87 = vst [vmem:[#allocation2 + $0x18] sm:$0xff] 0.0
      %88 = vst [vmem:[#allocation2 + $0x20] sm:$0xff] 0.0
      %89 = vst [vmem:[#allocation2 + $0x28] sm:$0xff] 0.0
      %90 = vst [vmem:[#allocation2 + $0x30] sm:$0xff] 0.0
      %91 = vst [vmem:[#allocation2 + $0x38] sm:$0xff] 0.0
      %92 = vst [vmem:[#allocation2 + $0x40] sm:$0xff] 0.0
      %93 = vst [vmem:[#allocation2 + $0x48] sm:$0xff] 0.0
      %94 = vst [vmem:[#allocation2 + $0x50] sm:$0xff] 0.0
      %95 = vst [vmem:[#allocation2 + $0x58] sm:$0xff] 0.0
      %96 = vst [vmem:[#allocation2 + $0x60] sm:$0xff] 0.0
      %97 = vst [vmem:[#allocation2 + $0x68] sm:$0xff] 0.0
      %98 = vst [vmem:[#allocation2 + $0x70] sm:$0xff] 0.0
      %99 = vst [vmem:[#allocation2 + $0x78] sm:$0xff] 0.0
    $region45: #{tpu_custom_call.1} parent=1 // pred_fallthru
      _
    %v100 = vld [vmem:[#allocation3] sm:$0xff]
    %v101 = vld [vmem:[#allocation3 + $0x8] sm:$0xff]
    %v102 = vld [vmem:[#allocation3 + $0x10] sm:$0xff]
    %v103 = vld [vmem:[#allocation3 + $0x18] sm:$0xff]
    %v104 = vunpack.c.l.s8.bf16 %v100
    %v105 = vunpack.c.h.s8.bf16 %v100
    %v106 = vunpack.c.l.s8.bf16 %v101
    %v107 = vunpack.c.h.s8.bf16 %v101
    %v108 = vunpack.c.l.s8.bf16 %v102
    %v109 = vunpack.c.h.s8.bf16 %v102
    %v110 = vunpack.c.l.s8.bf16 %v103
    %v111 = vunpack.c.h.s8.bf16 %v103
    %s112 = smul.u32 0, 128
    %s113 = sshra.s32 %s112, 3
    %s114 = sand.u32 %s112, 7
    %s115 = smul.addr %s113, 4
    %s116 = scalar_lea.vmem [#allocation6], %s115
    %v117 = vld [vmem:[%s116] sm:$0xf]
    %v118 = vld [vmem:[%s116 + $0x4] sm:$0xf]
    %v119 = vld [vmem:[%s116 + $0x8] sm:$0xf]
    %v120 = vld [vmem:[%s116 + $0xc] sm:$0xf]
    %v121 = vld [vmem:[%s116 + $0x10] sm:$0xf]
    %v122 = vld [vmem:[%s116 + $0x14] sm:$0xf]
    %v123 = vld [vmem:[%s116 + $0x18] sm:$0xf]
    %v124 = vld [vmem:[%s116 + $0x1c] sm:$0xf]
    %v125 = vld [vmem:[%s116 + $0x20] sm:$0xf]
    %v126 = vld [vmem:[%s116 + $0x24] sm:$0xf]
    %v127 = vld [vmem:[%s116 + $0x28] sm:$0xf]
    %v128 = vld [vmem:[%s116 + $0x2c] sm:$0xf]
    %v129 = vld [vmem:[%s116 + $0x30] sm:$0xf]
    %v130 = vld [vmem:[%s116 + $0x34] sm:$0xf]
    %v131 = vld [vmem:[%s116 + $0x38] sm:$0xf]
    %v132 = vld [vmem:[%s116 + $0x3c] sm:$0xf]
    %v133 = vld [vmem:[#allocation2] sm:$0xff]
    %v134 = vld [vmem:[#allocation2 + $0x8] sm:$0xff]
    %v135 = vld [vmem:[#allocation2 + $0x10] sm:$0xff]
    %v136 = vld [vmem:[#allocation2 + $0x18] sm:$0xff]
    %v137 = vld [vmem:[#allocation2 + $0x20] sm:$0xff]
    %v138 = vld [vmem:[#allocation2 + $0x28] sm:$0xff]
    %v139 = vld [vmem:[#allocation2 + $0x30] sm:$0xff]
    %v140 = vld [vmem:[#allocation2 + $0x38] sm:$0xff]
    %v141 = vld [vmem:[#allocation2 + $0x40] sm:$0xff]
    %v142 = vld [vmem:[#allocation2 + $0x48] sm:$0xff]
    %v143 = vld [vmem:[#allocation2 + $0x50] sm:$0xff]
    %v144 = vld [vmem:[#allocation2 + $0x58] sm:$0xff]
    %v145 = vld [vmem:[#allocation2 + $0x60] sm:$0xff]
    %v146 = vld [vmem:[#allocation2 + $0x68] sm:$0xff]
    %v147 = vld [vmem:[#allocation2 + $0x70] sm:$0xff]
    %v148 = vld [vmem:[#allocation2 + $0x78] sm:$0xff]
    %v165 = vunpack.c.l.b16 %v117
    %v166 = vunpack.c.l.b16 %v118
    %v167 = vunpack.c.l.b16 %v119
    %v168 = vunpack.c.l.b16 %v120
    %v169 = vunpack.c.l.b16 %v121
    %v170 = vunpack.c.l.b16 %v122
    %v171 = vunpack.c.l.b16 %v123
    %v172 = vunpack.c.l.b16 %v124
    %v173 = vunpack.c.l.b16 %v125
    %v174 = vunpack.c.l.b16 %v126
    %v175 = vunpack.c.l.b16 %v127
    %v176 = vunpack.c.l.b16 %v128
    %v177 = vunpack.c.l.b16 %v129
    %v178 = vunpack.c.l.b16 %v130
    %v179 = vunpack.c.l.b16 %v131
    %v180 = vunpack.c.l.b16 %v132
    %v181 = vpack.c.b16 %v166, %v165
    %v182 = vpack.c.b16 %v168, %v167
    %v183 = vpack.c.b16 %v170, %v169
    %v184 = vpack.c.b16 %v172, %v171
    %v185 = vpack.c.b16 %v174, %v173
    %v186 = vpack.c.b16 %v176, %v175
    %v187 = vpack.c.b16 %v178, %v177
    %v188 = vpack.c.b16 %v180, %v179
    %197 = vmatprep.subr.bf16.mxu0 0
    %198 = vmatpush1.bf16.msra.mxu0 %v181
    %199 = vmatprep.subr.bf16.mxu0 0
    %200 = vmatpush1.bf16.msra.mxu0 %v182
    %201 = vmatprep.subr.bf16.mxu0 0
    %202 = vmatpush1.bf16.msra.mxu0 %v183
    %203 = vmatprep.subr.bf16.mxu0 0
    %204 = vmatpush1.bf16.msra.mxu0 %v184
    %205 = vmatprep.subr.bf16.mxu0 0
    %206 = vmatpush1.bf16.msra.mxu0 %v185
    %207 = vmatprep.subr.bf16.mxu0 0
    %208 = vmatpush1.bf16.msra.mxu0 %v186
    %209 = vmatprep.subr.bf16.mxu0 0
    %210 = vmatpush1.bf16.msra.mxu0 %v187
    %211 = vmatprep.subr.bf16.mxu0 0
    %212 = vmatpush1.bf16.msra.mxu0 %v188
    %213 = vmatprep.subr.bf16.mxu0 0
    %214 = vmatpush1.bf16.msra.mxu0 0
    %215 = vmatprep.subr.bf16.mxu0 0
    %216 = vmatpush1.bf16.msra.mxu0 0
    %217 = vmatprep.subr.bf16.mxu0 0
    %218 = vmatpush1.bf16.msra.mxu0 0
    %219 = vmatprep.subr.bf16.mxu0 0
    %220 = vmatpush1.bf16.msra.mxu0 0
    %221 = vmatprep.subr.bf16.mxu0 0
    %222 = vmatpush1.bf16.msra.mxu0 0
    %223 = vmatprep.subr.bf16.mxu0 0
    %224 = vmatpush1.bf16.msra.mxu0 0
    %225 = vmatprep.subr.bf16.mxu0 0
    %226 = vmatpush1.bf16.msra.mxu0 0
    %227 = vmatprep.subr.bf16.mxu0 0
    %228 = vmatpush1.bf16.msra.mxu0 0
    %229 = vmatprep.mubr.bf16.mxu0 0
    %230 = vmatmul.mubr.bf16.gmra.mrb[0].mxu0 %v104
    %v231 = vpop.f32.mrb[0].mxu0
    %v232 = vadd.f32 0.0, %v231
    %v233 = vpop.f32.mrb[0].mxu0
    %v234 = vpop.f32.mrb[0].mxu0
    %v235 = vadd.f32 0.0, %v234
    %v236 = vpop.f32.mrb[0].mxu0
    %237 = vmatprep.mubr.bf16.mxu0 0
    %238 = vmatmul.mubr.bf16.gmra.mrb[0].mxu0 %v105
    %v239 = vpop.f32.mrb[0].mxu0
    %v240 = vadd.f32 0.0, %v239
    %v241 = vpop.f32.mrb[0].mxu0
    %v242 = vpop.f32.mrb[0].mxu0
    %v243 = vadd.f32 0.0, %v242
    %v244 = vpop.f32.mrb[0].mxu0
    %245 = vmatprep.mubr.bf16.mxu0 0
    %246 = vmatmul.mubr.bf16.gmra.mrb[0].mxu0 %v106
    %v247 = vpop.f32.mrb[0].mxu0
    %v248 = vadd.f32 0.0, %v247
    %v249 = vpop.f32.mrb[0].mxu0
    %v250 = vpop.f32.mrb[0].mxu0
    %v251 = vadd.f32 0.0, %v250
    %v252 = vpop.f32.mrb[0].mxu0
    %253 = vmatprep.mubr.bf16.mxu0 0
    %254 = vmatmul.mubr.bf16.gmra.mrb[0].mxu0 %v107
    %v255 = vpop.f32.mrb[0].mxu0
    %v256 = vadd.f32 0.0, %v255
    %v257 = vpop.f32.mrb[0].mxu0
    %v258 = vpop.f32.mrb[0].mxu0
    %v259 = vadd.f32 0.0, %v258
    %v260 = vpop.f32.mrb[0].mxu0
    %261 = vmatprep.mubr.bf16.mxu0 0
    %262 = vmatmul.mubr.bf16.gmra.mrb[0].mxu0 %v108
    %v263 = vpop.f32.mrb[0].mxu0
    %v264 = vadd.f32 0.0, %v263
    %v265 = vpop.f32.mrb[0].mxu0
    %v266 = vpop.f32.mrb[0].mxu0
    %v267 = vadd.f32 0.0, %v266
    %v268 = vpop.f32.mrb[0].mxu0
    %269 = vmatprep.mubr.bf16.mxu0 0
    %270 = vmatmul.mubr.bf16.gmra.mrb[0].mxu0 %v109
    %v271 = vpop.f32.mrb[0].mxu0
    %v272 = vadd.f32 0.0, %v271
    %v273 = vpop.f32.mrb[0].mxu0
    %v274 = vpop.f32.mrb[0].mxu0
    %v275 = vadd.f32 0.0, %v274
    %v276 = vpop.f32.mrb[0].mxu0
    %277 = vmatprep.mubr.bf16.mxu0 0
    %278 = vmatmul.mubr.bf16.gmra.mrb[0].mxu0 %v110
    %v279 = vpop.f32.mrb[0].mxu0
    %v280 = vadd.f32 0.0, %v279
    %v281 = vpop.f32.mrb[0].mxu0
    %v282 = vpop.f32.mrb[0].mxu0
    %v283 = vadd.f32 0.0, %v282
    %v284 = vpop.f32.mrb[0].mxu0
    %285 = vmatprep.mubr.bf16.mxu0 0
    %286 = vmatmul.mubr.bf16.gmra.mrb[0].mxu0 %v111
    %v287 = vpop.f32.mrb[0].mxu0
    %v288 = vadd.f32 0.0, %v287
    %v289 = vpop.f32.mrb[0].mxu0
    %v290 = vpop.f32.mrb[0].mxu0
    %v291 = vadd.f32 0.0, %v290
    %v292 = vpop.f32.mrb[0].mxu0
    %293 = vdwg.mxu0
    %v294 = vadd.f32 %v133, %v232
    %v295 = vadd.f32 %v134, %v235
    %v296 = vadd.f32 %v135, %v240
    %v297 = vadd.f32 %v136, %v243
    %v298 = vadd.f32 %v137, %v248
    %v299 = vadd.f32 %v138, %v251
    %v300 = vadd.f32 %v139, %v256
    %v301 = vadd.f32 %v140, %v259
    %v302 = vadd.f32 %v141, %v264
    %v303 = vadd.f32 %v142, %v267
    %v304 = vadd.f32 %v143, %v272
    %v305 = vadd.f32 %v144, %v275
    %v306 = vadd.f32 %v145, %v280
    %v307 = vadd.f32 %v146, %v283
    %v308 = vadd.f32 %v147, %v288
    %v309 = vadd.f32 %v148, %v291
    %310 = vst [vmem:[#allocation2] sm:$0xff] %v294
    %311 = vst [vmem:[#allocation2 + $0x8] sm:$0xff] %v295
    %312 = vst [vmem:[#allocation2 + $0x10] sm:$0xff] %v296
    %313 = vst [vmem:[#allocation2 + $0x18] sm:$0xff] %v297
    %314 = vst [vmem:[#allocation2 + $0x20] sm:$0xff] %v298
    %315 = vst [vmem:[#allocation2 + $0x28] sm:$0xff] %v299
    %316 = vst [vmem:[#allocation2 + $0x30] sm:$0xff] %v300
    %317 = vst [vmem:[#allocation2 + $0x38] sm:$0xff] %v301
    %318 = vst [vmem:[#allocation2 + $0x40] sm:$0xff] %v302
    %319 = vst [vmem:[#allocation2 + $0x48] sm:$0xff] %v303
    %320 = vst [vmem:[#allocation2 + $0x50] sm:$0xff] %v304
    %321 = vst [vmem:[#allocation2 + $0x58] sm:$0xff] %v305
    %322 = vst [vmem:[#allocation2 + $0x60] sm:$0xff] %v306
    %323 = vst [vmem:[#allocation2 + $0x68] sm:$0xff] %v307
    %324 = vst [vmem:[#allocation2 + $0x70] sm:$0xff] %v308
    %325 = vst [vmem:[#allocation2 + $0x78] sm:$0xff] %v309
    // Predicated region
    $region46: #{tpu_custom_call.1} parent=1 // pred_check
      %p326 = pneg %p80
    $region47: #{tpu_custom_call.1} parent=1 // pred_check_branch
      %328 = sbr.rel (%p326) target = $region49
    $region48: #{tpu_custom_call.1} parent=1 // pred_region
      %v329 = vld [vmem:[#allocation2] sm:$0xff]
      %v330 = vld [vmem:[#allocation2 + $0x8] sm:$0xff]
      %v331 = vld [vmem:[#allocation2 + $0x10] sm:$0xff]
      %v332 = vld [vmem:[#allocation2 + $0x18] sm:$0xff]
      %v333 = vld [vmem:[#allocation2 + $0x20] sm:$0xff]
      %v334 = vld [vmem:[#allocation2 + $0x28] sm:$0xff]
      %v335 = vld [vmem:[#allocation2 + $0x30] sm:$0xff]
      %v336 = vld [vmem:[#allocation2 + $0x38] sm:$0xff]
      %v337 = vld [vmem:[#allocation2 + $0x40] sm:$0xff]
      %v338 = vld [vmem:[#allocation2 + $0x48] sm:$0xff]
      %v339 = vld [vmem:[#allocation2 + $0x50] sm:$0xff]
      %v340 = vld [vmem:[#allocation2 + $0x58] sm:$0xff]
      %v341 = vld [vmem:[#allocation2 + $0x60] sm:$0xff]
      %v342 = vld [vmem:[#allocation2 + $0x68] sm:$0xff]
      %v343 = vld [vmem:[#allocation2 + $0x70] sm:$0xff]
      %v344 = vld [vmem:[#allocation2 + $0x78] sm:$0xff]
      %v345 = vpack.c.bf16 %v330, %v329
      %v346 = vpack.c.bf16 %v332, %v331
      %v347 = vpack.c.bf16 %v334, %v333
      %v348 = vpack.c.bf16 %v336, %v335
      %v349 = vpack.c.bf16 %v338, %v337
      %v350 = vpack.c.bf16 %v340, %v339
      %v351 = vpack.c.bf16 %v342, %v341
      %v352 = vpack.c.bf16 %v344, %v343
      %v353 = vld [vmem:[#allocation8] sm:$0xf]
      %v354 = vld [vmem:[#allocation8 + $0x4] sm:$0xf]
      %v355 = vld [vmem:[#allocation8 + $0x8] sm:$0xf]
      %v356 = vld [vmem:[#allocation8 + $0xc] sm:$0xf]
      %v357 = vld [vmem:[#allocation8 + $0x10] sm:$0xf]
      %v358 = vld [vmem:[#allocation8 + $0x14] sm:$0xf]
      %v359 = vld [vmem:[#allocation8 + $0x18] sm:$0xf]
      %v360 = vld [vmem:[#allocation8 + $0x1c] sm:$0xf]
      %v361 = vld [vmem:[#allocation8 + $0x20] sm:$0xf]
      %v362 = vld [vmem:[#allocation8 + $0x24] sm:$0xf]
      %v363 = vld [vmem:[#allocation8 + $0x28] sm:$0xf]
      %v364 = vld [vmem:[#allocation8 + $0x2c] sm:$0xf]
      %v365 = vld [vmem:[#allocation8 + $0x30] sm:$0xf]
      %v366 = vld [vmem:[#allocation8 + $0x34] sm:$0xf]
      %v367 = vld [vmem:[#allocation8 + $0x38] sm:$0xf]
      %v368 = vld [vmem:[#allocation8 + $0x3c] sm:$0xf]
      %v369 = vld [vmem:[%s3] sm:$0x1]
      %v371 = vlaneseq
      %v372 = vshrl.u32 %v371, 7
      %v373 = vsub.s32 0, %v372
      %v374 = vrot.slane %v369, %v373
      %v392 = vunpack.c.l.b16 %v353
      %v393 = vunpack.c.l.b16 %v354
      %v394 = vunpack.c.l.b16 %v355
      %v395 = vunpack.c.l.b16 %v356
      %v396 = vunpack.c.l.b16 %v357
      %v397 = vunpack.c.l.b16 %v358
      %v398 = vunpack.c.l.b16 %v359
      %v399 = vunpack.c.l.b16 %v360
      %v400 = vunpack.c.l.b16 %v361
      %v401 = vunpack.c.l.b16 %v362
      %v402 = vunpack.c.l.b16 %v363
      %v403 = vunpack.c.l.b16 %v364
      %v404 = vunpack.c.l.b16 %v365
      %v405 = vunpack.c.l.b16 %v366
      %v406 = vunpack.c.l.b16 %v367
      %v407 = vunpack.c.l.b16 %v368
      %v408 = vpack.c.b16 %v393, %v392
      %v409 = vpack.c.b16 %v395, %v394
      %v410 = vpack.c.b16 %v397, %v396
      %v411 = vpack.c.b16 %v399, %v398
      %v412 = vpack.c.b16 %v401, %v400
      %v413 = vpack.c.b16 %v403, %v402
      %v414 = vpack.c.b16 %v405, %v404
      %v415 = vpack.c.b16 %v407, %v406
      %424 = vmatprep.subr.bf16.mxu0 0
      %425 = vmatpush1.bf16.msra.mxu0 %v408
      %426 = vmatprep.subr.bf16.mxu0 0
      %427 = vmatpush1.bf16.msra.mxu0 %v409
      %428 = vmatprep.subr.bf16.mxu0 0
      %429 = vmatpush1.bf16.msra.mxu0 %v410
      %430 = vmatprep.subr.bf16.mxu0 0
      %431 = vmatpush1.bf16.msra.mxu0 %v411
      %432 = vmatprep.subr.bf16.mxu0 0
      %433 = vmatpush1.bf16.msra.mxu0 %v412
      %434 = vmatprep.subr.bf16.mxu0 0
      %435 = vmatpush1.bf16.msra.mxu0 %v413
      %436 = vmatprep.subr.bf16.mxu0 0
      %437 = vmatpush1.bf16.msra.mxu0 %v414
      %438 = vmatprep.subr.bf16.mxu0 0
      %439 = vmatpush1.bf16.msra.mxu0 %v415
      %440 = vmatprep.subr.bf16.mxu0 0
      %441 = vmatpush1.bf16.msra.mxu0 0
      %442 = vmatprep.subr.bf16.mxu0 0
      %443 = vmatpush1.bf16.msra.mxu0 0
      %444 = vmatprep.subr.bf16.mxu0 0
      %445 = vmatpush1.bf16.msra.mxu0 0
      %446 = vmatprep.subr.bf16.mxu0 0
      %447 = vmatpush1.bf16.msra.mxu0 0
      %448 = vmatprep.subr.bf16.mxu0 0
      %449 = vmatpush1.bf16.msra.mxu0 0
      %450 = vmatprep.subr.bf16.mxu0 0
      %451 = vmatpush1.bf16.msra.mxu0 0
      %452 = vmatprep.subr.bf16.mxu0 0
      %453 = vmatpush1.bf16.msra.mxu0 0
      %454 = vmatprep.subr.bf16.mxu0 0
      %455 = vmatpush1.bf16.msra.mxu0 0
      %456 = vmatprep.mubr.bf16.mxu0 0
      %457 = vmatmul.mubr.bf16.gmra.mrb[0].mxu0 %v345
      %v458 = vpop.f32.mrb[0].mxu0
      %v459 = vadd.f32 %v374, %v458
      %v460 = vpop.f32.mrb[0].mxu0
      %v461 = vpop.f32.mrb[0].mxu0
      %v462 = vadd.f32 %v374, %v461
      %v463 = vpop.f32.mrb[0].mxu0
      %464 = vmatprep.mubr.bf16.mxu0 0
      %465 = vmatmul.mubr.bf16.gmra.mrb[0].mxu0 %v346
      %v466 = vpop.f32.mrb[0].mxu0
      %v467 = vadd.f32 %v374, %v466
      %v468 = vpop.f32.mrb[0].mxu0
      %v469 = vpop.f32.mrb[0].mxu0
      %v470 = vadd.f32 %v374, %v469
      %v471 = vpop.f32.mrb[0].mxu0
      %472 = vmatprep.mubr.bf16.mxu0 0
      %473 = vmatmul.mubr.bf16.gmra.mrb[0].mxu0 %v347
      %v474 = vpop.f32.mrb[0].mxu0
      %v475 = vadd.f32 %v374, %v474
      %v476 = vpop.f32.mrb[0].mxu0
      %v477 = vpop.f32.mrb[0].mxu0
      %v478 = vadd.f32 %v374, %v477
      %v479 = vpop.f32.mrb[0].mxu0
      %480 = vmatprep.mubr.bf16.mxu0 0
      %481 = vmatmul.mubr.bf16.gmra.mrb[0].mxu0 %v348
      %v482 = vpop.f32.mrb[0].mxu0
      %v483 = vadd.f32 %v374, %v482
      %v484 = vpop.f32.mrb[0].mxu0
      %v485 = vpop.f32.mrb[0].mxu0
      %v486 = vadd.f32 %v374, %v485
      %v487 = vpop.f32.mrb[0].mxu0
      %488 = vmatprep.mubr.bf16.mxu0 0
      %489 = vmatmul.mubr.bf16.gmra.mrb[0].mxu0 %v349
      %v490 = vpop.f32.mrb[0].mxu0
      %v491 = vadd.f32 %v374, %v490
      %v492 = vpop.f32.mrb[0].mxu0
      %v493 = vpop.f32.mrb[0].mxu0
      %v494 = vadd.f32 %v374, %v493
      %v495 = vpop.f32.mrb[0].mxu0
      %496 = vmatprep.mubr.bf16.mxu0 0
      %497 = vmatmul.mubr.bf16.gmra.mrb[0].mxu0 %v350
      %v498 = vpop.f32.mrb[0].mxu0
      %v499 = vadd.f32 %v374, %v498
      %v500 = vpop.f32.mrb[0].mxu0
      %v501 = vpop.f32.mrb[0].mxu0
      %v502 = vadd.f32 %v374, %v501
      %v503 = vpop.f32.mrb[0].mxu0
      %504 = vmatprep.mubr.bf16.mxu0 0
      %505 = vmatmul.mubr.bf16.gmra.mrb[0].mxu0 %v351
      %v506 = vpop.f32.mrb[0].mxu0
      %v507 = vadd.f32 %v374, %v506
      %v508 = vpop.f32.mrb[0].mxu0
      %v509 = vpop.f32.mrb[0].mxu0
      %v510 = vadd.f32 %v374, %v509
      %v511 = vpop.f32.mrb[0].mxu0
      %512 = vmatprep.mubr.bf16.mxu0 0
      %513 = vmatmul.mubr.bf16.gmra.mrb[0].mxu0 %v352
      %v514 = vpop.f32.mrb[0].mxu0
      %v515 = vadd.f32 %v374, %v514
      %v516 = vpop.f32.mrb[0].mxu0
      %v517 = vpop.f32.mrb[0].mxu0
      %v518 = vadd.f32 %v374, %v517
      %v519 = vpop.f32.mrb[0].mxu0
      %520 = vdwg.mxu0
      %v521 = vmax.f32 %v459, 0.0
      %v522 = vmax.f32 %v462, 0.0
      %v523 = vmax.f32 %v467, 0.0
      %v524 = vmax.f32 %v470, 0.0
      %v525 = vmax.f32 %v475, 0.0
      %v526 = vmax.f32 %v478, 0.0
      %v527 = vmax.f32 %v483, 0.0
      %v528 = vmax.f32 %v486, 0.0
      %v529 = vmax.f32 %v491, 0.0
      %v530 = vmax.f32 %v494, 0.0
      %v531 = vmax.f32 %v499, 0.0
      %v532 = vmax.f32 %v502, 0.0
      %v533 = vmax.f32 %v507, 0.0
      %v534 = vmax.f32 %v510, 0.0
      %v535 = vmax.f32 %v515, 0.0
      %v536 = vmax.f32 %v518, 0.0
      %v537 = vpack.c.bf16 %v522, %v521
      %v538 = vpack.c.bf16 %v524, %v523
      %v539 = vpack.c.bf16 %v526, %v525
      %v540 = vpack.c.bf16 %v528, %v527
      %v541 = vpack.c.bf16 %v530, %v529
      %v542 = vpack.c.bf16 %v532, %v531
      %v543 = vpack.c.bf16 %v534, %v533
      %v544 = vpack.c.bf16 %v536, %v535
      %v545 = vld [vmem:[#allocation9] sm:$0xf]
      %v546 = vld [vmem:[#allocation9 + $0x4] sm:$0xf]
      %v547 = vld [vmem:[#allocation9 + $0x8] sm:$0xf]
      %v548 = vld [vmem:[#allocation9 + $0xc] sm:$0xf]
      %v549 = vld [vmem:[#allocation9 + $0x10] sm:$0xf]
      %v550 = vld [vmem:[#allocation9 + $0x14] sm:$0xf]
      %v551 = vld [vmem:[#allocation9 + $0x18] sm:$0xf]
      %v552 = vld [vmem:[#allocation9 + $0x1c] sm:$0xf]
      %v553 = vld [vmem:[#allocation9 + $0x20] sm:$0xf]
      %v554 = vld [vmem:[#allocation9 + $0x24] sm:$0xf]
      %v555 = vld [vmem:[#allocation9 + $0x28] sm:$0xf]
      %v556 = vld [vmem:[#allocation9 + $0x2c] sm:$0xf]
      %v557 = vld [vmem:[#allocation9 + $0x30] sm:$0xf]
      %v558 = vld [vmem:[#allocation9 + $0x34] sm:$0xf]
      %v559 = vld [vmem:[#allocation9 + $0x38] sm:$0xf]
      %v560 = vld [vmem:[#allocation9 + $0x3c] sm:$0xf]
      %v561 = vld [vmem:[%s5] sm:$0x1]
      %v563 = vlaneseq
      %v564 = vshrl.u32 %v563, 7
      %v565 = vsub.s32 0, %v564
      %v566 = vrot.slane %v561, %v565
      %v584 = vunpack.c.l.b16 %v545
      %v585 = vunpack.c.l.b16 %v546
      %v586 = vunpack.c.l.b16 %v547
      %v587 = vunpack.c.l.b16 %v548
      %v588 = vunpack.c.l.b16 %v549
      %v589 = vunpack.c.l.b16 %v550
      %v590 = vunpack.c.l.b16 %v551
      %v591 = vunpack.c.l.b16 %v552
      %v592 = vunpack.c.l.b16 %v553
      %v593 = vunpack.c.l.b16 %v554
      %v594 = vunpack.c.l.b16 %v555
      %v595 = vunpack.c.l.b16 %v556
      %v596 = vunpack.c.l.b16 %v557
      %v597 = vunpack.c.l.b16 %v558
      %v598 = vunpack.c.l.b16 %v559
      %v599 = vunpack.c.l.b16 %v560
      %v600 = vpack.c.b16 %v585, %v584
      %v601 = vpack.c.b16 %v587, %v586
      %v602 = vpack.c.b16 %v589, %v588
      %v603 = vpack.c.b16 %v591, %v590
      %v604 = vpack.c.b16 %v593, %v592
      %v605 = vpack.c.b16 %v595, %v594
      %v606 = vpack.c.b16 %v597, %v596
      %v607 = vpack.c.b16 %v599, %v598
      %616 = vmatprep.subr.bf16.mxu0 0
      %617 = vmatpush1.bf16.msra.mxu0 %v600
      %618 = vmatprep.subr.bf16.mxu0 0
      %619 = vmatpush1.bf16.msra.mxu0 %v601
      %620 = vmatprep.subr.bf16.mxu0 0
      %621 = vmatpush1.bf16.msra.mxu0 %v602
      %622 = vmatprep.subr.bf16.mxu0 0
      %623 = vmatpush1.bf16.msra.mxu0 %v603
      %624 = vmatprep.subr.bf16.mxu0 0
      %625 = vmatpush1.bf16.msra.mxu0 %v604
      %626 = vmatprep.subr.bf16.mxu0 0
      %627 = vmatpush1.bf16.msra.mxu0 %v605
      %628 = vmatprep.subr.bf16.mxu0 0
      %629 = vmatpush1.bf16.msra.mxu0 %v606
      %630 = vmatprep.subr.bf16.mxu0 0
      %631 = vmatpush1.bf16.msra.mxu0 %v607
      %632 = vmatprep.subr.bf16.mxu0 0
      %633 = vmatpush1.bf16.msra.mxu0 0
      %634 = vmatprep.subr.bf16.mxu0 0
      %635 = vmatpush1.bf16.msra.mxu0 0
      %636 = vmatprep.subr.bf16.mxu0 0
      %637 = vmatpush1.bf16.msra.mxu0 0
      %638 = vmatprep.subr.bf16.mxu0 0
      %639 = vmatpush1.bf16.msra.mxu0 0
      %640 = vmatprep.subr.bf16.mxu0 0
      %641 = vmatpush1.bf16.msra.mxu0 0
      %642 = vmatprep.subr.bf16.mxu0 0
      %643 = vmatpush1.bf16.msra.mxu0 0
      %644 = vmatprep.subr.bf16.mxu0 0
      %645 = vmatpush1.bf16.msra.mxu0 0
      %646 = vmatprep.subr.bf16.mxu0 0
      %647 = vmatpush1.bf16.msra.mxu0 0
      %648 = vmatprep.mubr.bf16.mxu0 0
      %649 = vmatmul.mubr.bf16.gmra.mrb[0].mxu0 %v537
      %v650 = vpop.f32.mrb[0].mxu0
      %v651 = vadd.f32 %v566, %v650
      %v652 = vpop.f32.mrb[0].mxu0
      %v653 = vpop.f32.mrb[0].mxu0
      %v654 = vadd.f32 %v566, %v653
      %v655 = vpop.f32.mrb[0].mxu0
      %656 = vmatprep.mubr.bf16.mxu0 0
      %657 = vmatmul.mubr.bf16.gmra.mrb[0].mxu0 %v538
      %v658 = vpop.f32.mrb[0].mxu0
      %v659 = vadd.f32 %v566, %v658
      %v660 = vpop.f32.mrb[0].mxu0
      %v661 = vpop.f32.mrb[0].mxu0
      %v662 = vadd.f32 %v566, %v661
      %v663 = vpop.f32.mrb[0].mxu0
      %664 = vmatprep.mubr.bf16.mxu0 0
      %665 = vmatmul.mubr.bf16.gmra.mrb[0].mxu0 %v539
      %v666 = vpop.f32.mrb[0].mxu0
      %v667 = vadd.f32 %v566, %v666
      %v668 = vpop.f32.mrb[0].mxu0
      %v669 = vpop.f32.mrb[0].mxu0
      %v670 = vadd.f32 %v566, %v669
      %v671 = vpop.f32.mrb[0].mxu0
      %672 = vmatprep.mubr.bf16.mxu0 0
      %673 = vmatmul.mubr.bf16.gmra.mrb[0].mxu0 %v540
      %v674 = vpop.f32.mrb[0].mxu0
      %v675 = vadd.f32 %v566, %v674
      %v676 = vpop.f32.mrb[0].mxu0
      %v677 = vpop.f32.mrb[0].mxu0
      %v678 = vadd.f32 %v566, %v677
      %v679 = vpop.f32.mrb[0].mxu0
      %680 = vmatprep.mubr.bf16.mxu0 0
      %681 = vmatmul.mubr.bf16.gmra.mrb[0].mxu0 %v541
      %v682 = vpop.f32.mrb[0].mxu0
      %v683 = vadd.f32 %v566, %v682
      %v684 = vpop.f32.mrb[0].mxu0
      %v685 = vpop.f32.mrb[0].mxu0
      %v686 = vadd.f32 %v566, %v685
      %v687 = vpop.f32.mrb[0].mxu0
      %688 = vmatprep.mubr.bf16.mxu0 0
      %689 = vmatmul.mubr.bf16.gmra.mrb[0].mxu0 %v542
      %v690 = vpop.f32.mrb[0].mxu0
      %v691 = vadd.f32 %v566, %v690
      %v692 = vpop.f32.mrb[0].mxu0
      %v693 = vpop.f32.mrb[0].mxu0
      %v694 = vadd.f32 %v566, %v693
      %v695 = vpop.f32.mrb[0].mxu0
      %696 = vmatprep.mubr.bf16.mxu0 0
      %697 = vmatmul.mubr.bf16.gmra.mrb[0].mxu0 %v543
      %v698 = vpop.f32.mrb[0].mxu0
      %v699 = vadd.f32 %v566, %v698
      %v700 = vpop.f32.mrb[0].mxu0
      %v701 = vpop.f32.mrb[0].mxu0
      %v702 = vadd.f32 %v566, %v701
      %v703 = vpop.f32.mrb[0].mxu0
      %704 = vmatprep.mubr.bf16.mxu0 0
      %705 = vmatmul.mubr.bf16.gmra.mrb[0].mxu0 %v544
      %v706 = vpop.f32.mrb[0].mxu0
      %v707 = vadd.f32 %v566, %v706
      %v708 = vpop.f32.mrb[0].mxu0
      %v709 = vpop.f32.mrb[0].mxu0
      %v710 = vadd.f32 %v566, %v709
      %v711 = vpop.f32.mrb[0].mxu0
      %712 = vdwg.mxu0
      %v713 = vmax.f32 %v651, 0.0
      %v714 = vmax.f32 %v654, 0.0
      %v715 = vmax.f32 %v659, 0.0
      %v716 = vmax.f32 %v662, 0.0
      %v717 = vmax.f32 %v667, 0.0
      %v718 = vmax.f32 %v670, 0.0
      %v719 = vmax.f32 %v675, 0.0
      %v720 = vmax.f32 %v678, 0.0
      %v721 = vmax.f32 %v683, 0.0
      %v722 = vmax.f32 %v686, 0.0
      %v723 = vmax.f32 %v691, 0.0
      %v724 = vmax.f32 %v694, 0.0
      %v725 = vmax.f32 %v699, 0.0
      %v726 = vmax.f32 %v702, 0.0
      %v727 = vmax.f32 %v707, 0.0
      %v728 = vmax.f32 %v710, 0.0
      %v729 = vpack.c.bf16 %v714, %v713
      %v730 = vpack.c.bf16 %v716, %v715
      %v731 = vpack.c.bf16 %v718, %v717
      %v732 = vpack.c.bf16 %v720, %v719
      %v733 = vpack.c.bf16 %v722, %v721
      %v734 = vpack.c.bf16 %v724, %v723
      %v735 = vpack.c.bf16 %v726, %v725
      %v736 = vpack.c.bf16 %v728, %v727
      %v745 = vunpack.c.l.b16 %v729
      %v746 = vunpack.c.h.b16 %v729
      %v747 = vunpack.c.l.b16 %v730
      %v748 = vunpack.c.h.b16 %v730
      %v749 = vunpack.c.l.b16 %v731
      %v750 = vunpack.c.h.b16 %v731
      %v751 = vunpack.c.l.b16 %v732
      %v752 = vunpack.c.h.b16 %v732
      %v753 = vunpack.c.l.b16 %v733
      %v754 = vunpack.c.h.b16 %v733
      %v755 = vunpack.c.l.b16 %v734
      %v756 = vunpack.c.h.b16 %v734
      %v757 = vunpack.c.l.b16 %v735
      %v758 = vunpack.c.h.b16 %v735
      %v759 = vunpack.c.l.b16 %v736
      %v760 = vunpack.c.h.b16 %v736
      %v761 = vpack.c.b16 %v745, %v745
      %v762 = vpack.c.b16 %v746, %v746
      %v763 = vpack.c.b16 %v747, %v747
      %v764 = vpack.c.b16 %v748, %v748
      %v765 = vpack.c.b16 %v749, %v749
      %v766 = vpack.c.b16 %v750, %v750
      %v767 = vpack.c.b16 %v751, %v751
      %v768 = vpack.c.b16 %v752, %v752
      %v769 = vpack.c.b16 %v753, %v753
      %v770 = vpack.c.b16 %v754, %v754
      %v771 = vpack.c.b16 %v755, %v755
      %v772 = vpack.c.b16 %v756, %v756
      %v773 = vpack.c.b16 %v757, %v757
      %v774 = vpack.c.b16 %v758, %v758
      %v775 = vpack.c.b16 %v759, %v759
      %v776 = vpack.c.b16 %v760, %v760
      %793 = vst [vmem:[#allocation11] sm:$0xf] %v761
      %794 = vst [vmem:[#allocation11 + $0x4] sm:$0xf] %v762
      %795 = vst [vmem:[#allocation11 + $0x8] sm:$0xf] %v763
      %796 = vst [vmem:[#allocation11 + $0xc] sm:$0xf] %v764
      %797 = vst [vmem:[#allocation11 + $0x10] sm:$0xf] %v765
      %798 = vst [vmem:[#allocation11 + $0x14] sm:$0xf] %v766
      %799 = vst [vmem:[#allocation11 + $0x18] sm:$0xf] %v767
      %800 = vst [vmem:[#allocation11 + $0x1c] sm:$0xf] %v768
      %801 = vst [vmem:[#allocation11 + $0x20] sm:$0xf] %v769
      %802 = vst [vmem:[#allocation11 + $0x24] sm:$0xf] %v770
      %803 = vst [vmem:[#allocation11 + $0x28] sm:$0xf] %v771
      %804 = vst [vmem:[#allocation11 + $0x2c] sm:$0xf] %v772
      %805 = vst [vmem:[#allocation11 + $0x30] sm:$0xf] %v773
      %806 = vst [vmem:[#allocation11 + $0x34] sm:$0xf] %v774
      %807 = vst [vmem:[#allocation11 + $0x38] sm:$0xf] %v775
      %808 = vst [vmem:[#allocation11 + $0x3c] sm:$0xf] %v776
    $region49: #{tpu_custom_call.1} parent=1 // pred_fallthru
      _
    // Predicated region
    $region50: #{tpu_custom_call.1} parent=1 // pred_check
      _
    $region51: #{tpu_custom_call.1} parent=1 // pred_check_branch
      %810 = sbr.rel (0) target = $region53
    $region52: #{tpu_custom_call.1} parent=1 // pred_region
      %s812 = ssub.s32 1024, 1024
      %813 = vsyncadd [#allocation5], %s812
      %s814 = sshll.u32 [#allocation11], 4
      %s815 = int_to_ptr.vmem [resolvable:$true] %s814
      %820 = dma.vmem_to_hbm [thread:$0]  %s815, 1024, %s6, [#allocation5], 64, 64, 4
    $region53: #{tpu_custom_call.1} parent=1 // pred_fallthru
      _
    // Predicated region
    $region54: #{tpu_custom_call.1} parent=1 // pred_check
      _
    $region55: #{tpu_custom_call.1} parent=1 // pred_check_branch
      %822 = sbr.rel (0) target = $region57
    $region56: #{tpu_custom_call.1} parent=1 // pred_region
      %823 = dma.done [#allocation5], 1024
    $region57: #{tpu_custom_call.1} parent=1 // pred_fallthru
      _
    %824 = vsyncpa [#allocation4], 1
    %825 = vsyncpa [#allocation7], 1
    %826 = vsyncpa [#allocation10], 1
    %827 = vsyncpa [#allocation5], 1

</llo_original>
